<compile_context>
chip_gen: v6e
topology: v6e:2x2x1
jax: 0.10.0
libtpu: 0.0.40
codegen_flags: <defaults>
</compile_context>

<pallas_src>
import functools

import jax
import jax.numpy as jnp
from jax.experimental import pallas as pl
from jax.experimental.pallas import tpu as pltpu

LANES = 128
MAX_BLOCK_ROWS = 4096   # 4096*128*4B = 2 MiB per f32 input block; 2 inputs x
                        # 2 pipeline buffers = 8 MiB -> fits the 16 MiB v5e
                        # scoped-VMEM default (and easily v6e/v7x's 32 MiB).


def _round_up(x, m):
    return (x + m - 1) // m * m


def _qfocal_kernel(pred_ref, true_ref, out_ref, *,
                   gamma, alpha, n, block_rows, needs_mask):
    i = pl.program_id(0)

    @pl.when(i == 0)
    def _():
        out_ref[...] = jnp.zeros_like(out_ref)

    x = pred_ref[...].astype(jnp.float32)   # logits
    t = true_ref[...].astype(jnp.float32)   # targets in [0, 1]

    # Shared transcendental: e = exp(-|x|).
    e = jnp.exp(-jnp.abs(x))

    # BCEWithLogitsLoss(reduction='none'), numerically stable:
    #   max(x, 0) - x*t + log(1 + exp(-|x|))
    bce = jnp.maximum(x, 0.0) - x * t + jnp.log1p(e)

    # sigmoid(x) reusing e: x>=0 -> 1/(1+e), x<0 -> e/(1+e).
    # approx=True -> single EUP vrcp; perturbs the result at the ~1e-4 level.
    r = pl.reciprocal(1.0 + e, approx=True)
    pred_prob = jnp.where(x >= 0.0, r, e * r)

    # alpha_factor = t*alpha + (1-t)*(1-alpha), constants folded: 2 VPU ops.
    alpha_factor = t * (2.0 * alpha - 1.0) + (1.0 - alpha)

    d = jnp.abs(t - pred_prob)
    if gamma == 1.5:
        modulating = d * jnp.sqrt(d)        # avoids exp(g*log(d)) pair
    elif gamma == 2.0:
        modulating = d * d
    elif gamma == 1.0:
        modulating = d
    else:
        modulating = d ** gamma

    loss = bce * alpha_factor * modulating

    def partial_sum(v):
        # vreg-shaped accumulation: leading-axis sum is plain VPU adds; the
        # single cross-lane/sublane reduction is deferred to the wrapper.
        return v.reshape(block_rows // 8, 8, LANES).sum(axis=0)

    if needs_mask:
        last = pl.num_programs(0) - 1

        @pl.when(i != last)
        def _():
            out_ref[...] += partial_sum(loss)

        @pl.when(i == last)
        def _():
            # Mask everything past the real element count: zero-padded tail
            # and/or the undefined remainder of a partial last block.
            base = i * (block_rows * LANES)
            row_idx = jax.lax.broadcasted_iota(jnp.int32, (block_rows, LANES), 0)
            col_idx = jax.lax.broadcasted_iota(jnp.int32, (block_rows, LANES), 1)
            gidx = base + row_idx * LANES + col_idx
            out_ref[...] += partial_sum(jnp.where(gidx < n, loss, 0.0))
    else:
        out_ref[...] += partial_sum(loss)


def qfocal_loss(pred, true, *, gamma=1.5, alpha=0.25, reduction='mean'):
    """QFocalLoss forward. `reduction` is the original loss_fcn.reduction."""
    assert pred.shape == true.shape
    n = int(pred.size)

    # Sub-32-bit dtypes pack along sublanes -> block rows must be a multiple
    # of 8 * packing (8 for f32, 16 for bf16/f16, 32 for 8-bit types).
    itemsize = jnp.dtype(pred.dtype).itemsize
    row_align = 8 * max(1, 4 // itemsize)
    quantum = row_align * LANES

    pred_flat = pred.reshape(-1)            # bitcast (no HBM copy)
    true_flat = true.reshape(-1)
    if n % quantum:
        # Rare fallback (element count not a multiple of row_align*128): pad
        # <= quantum-1 elements so the lane-dense reshape is legal.
        # TODO(synk): jnp.pad still copies the whole array in this case; a
        # fully zero-copy ragged tail would need a second tiny pallas_call.
        pad = quantum - n % quantum
        pred_flat = jnp.pad(pred_flat, (0, pad))
        true_flat = jnp.pad(true_flat, (0, pad))

    rows = pred_flat.size // LANES          # multiple of row_align
    p2 = pred_flat.reshape(rows, LANES)     # bitcast (no HBM copy)
    t2 = true_flat.reshape(rows, LANES)

    block_rows = min(MAX_BLOCK_ROWS, rows)  # multiple of row_align, <= rows
    num_tiles = -(-rows // block_rows)
    # Mask needed iff the grid covers elements past n.
    needs_mask = num_tiles * block_rows * LANES != n

    kernel = functools.partial(
        _qfocal_kernel, gamma=float(gamma), alpha=float(alpha), n=n,
        block_rows=block_rows, needs_mask=needs_mask)

    in_spec = pl.BlockSpec((block_rows, LANES), lambda i: (i, 0))

    partials = pl.pallas_call(
        kernel,
        out_shape=jax.ShapeDtypeStruct((8, LANES), jnp.float32),
        grid_spec=pltpu.PrefetchScalarGridSpec(
            num_scalar_prefetch=0,
            grid=(num_tiles,),
            in_specs=[in_spec, in_spec],
            # Same output block for every tile -> stays resident in VMEM and
            # acts as the accumulator (no scratch buffer needed).
            out_specs=pl.BlockSpec((8, LANES), lambda i: (0, 0)),
        ),
        # TODO(synk): on v7x megacore a leading "parallel" split across the
        # two TensorCores would roughly halve wall time for large inputs.
        compiler_params=pltpu.CompilerParams(
            dimension_semantics=("arbitrary",)),
    )(p2, t2)

    total = jnp.sum(partials)
    if reduction == 'mean':
        return total / n
    elif reduction == 'sum':
        return total
    else:
        # TODO(synk): reduction='none' (elementwise output) not wired through
        # the scalar-accumulator kernel; YOLOv5 uses 'mean'.
        raise NotImplementedError("reduction='none' not implemented")


def _qfocal_ref(pred, true, gamma=1.5, alpha=0.25):
    x = pred.astype(jnp.float32)
    t = true.astype(jnp.float32)
    bce = jnp.maximum(x, 0.0) - x * t + jnp.log1p(jnp.exp(-jnp.abs(x)))
    p = jax.nn.sigmoid(x)
    alpha_factor = t * alpha + (1.0 - t) * (1.0 - alpha)
    modulating = jnp.abs(t - p) ** gamma
    return jnp.mean(bce * alpha_factor * modulating)


if __name__ == "__main__":
    key = jax.random.PRNGKey(0)
    k1, k2 = jax.random.split(key)
    # NCHW like PyTorch: batch=2, channels=4, spatial=16x16
    pred = jax.random.normal(k1, (2, 4, 16, 16), dtype=jnp.float32)
    true = jax.random.uniform(k2, (2, 4, 16, 16), dtype=jnp.float32)

    out = qfocal_loss(pred, true, gamma=1.5, alpha=0.25, reduction='mean')
    out = jax.block_until_ready(out)
    ref = _qfocal_ref(pred, true)
    # Tolerance loosened vs. exact-reciprocal version because of
    # pl.reciprocal(..., approx=True) in the sigmoid path.
    assert jnp.allclose(out, ref, rtol=2e-3, atol=1e-6), (out, ref)

    # Ragged size exercising the (gated) in-kernel tail mask.
    k3, k4 = jax.random.split(k2)
    pred2 = jax.random.normal(k3, (3, 5, 7, 11), dtype=jnp.float32)
    true2 = jax.random.uniform(k4, (3, 5, 7, 11), dtype=jnp.float32)
    out2 = jax.block_until_ready(qfocal_loss(pred2, true2))
    ref2 = _qfocal_ref(pred2, true2)
    assert jnp.allclose(out2, ref2, rtol=2e-3, atol=1e-6), (out2, ref2)

    # bf16 inputs end-to-end (halved HBM read traffic; (16,128) row align).
    pred3 = pred.astype(jnp.bfloat16)
    true3 = true.astype(jnp.bfloat16)
    out3 = jax.block_until_ready(qfocal_loss(pred3, true3))
    ref3 = _qfocal_ref(pred3, true3)
    assert jnp.allclose(out3, ref3, rtol=2e-3, atol=1e-6), (out3, ref3)

    print("KERNEL_OK")
</pallas_src>

<mosaic_0001>
module attributes {stable_mosaic.version = 11 : i64} {
  func.func @_qfocal_kernel(%arg0: i32, %arg1: memref<16x128xf32, #tpu.memory_space<vmem>>, %arg2: memref<16x128xf32, #tpu.memory_space<vmem>>, %arg3: memref<8x128xf32, #tpu.memory_space<vmem>>) attributes {dimension_semantics = [#tpu.dimension_semantics<arbitrary>], iteration_bounds = array<i64: 1>, scalar_prefetch = 0 : i64, scratch_operands = 0 : i64, tpu.core_type = #tpu.core_type<tc>, window_params = [{transform_indices = @transform_0, window_bounds = array<i64: 16, 128>}, {transform_indices = @transform_1, window_bounds = array<i64: 16, 128>}, {pipeline_mode = #tpu.pipeline_mode<synchronous>, transform_indices = @transform_2, window_bounds = array<i64: 8, 128>}]} {
    %c0_i32 = arith.constant 0 : i32
    %0 = arith.cmpi eq, %arg0, %c0_i32 : i32
    %1 = arith.extui %0 : i1 to i32
    %c0_i32_0 = arith.constant 0 : i32
    %2 = arith.cmpi ne, %1, %c0_i32_0 : i32
    scf.if %2 {
      %cst_14 = arith.constant 0.000000e+00 : f32
      %37 = vector.broadcast %cst_14 : f32 to vector<8x128xf32>
      %c0_15 = arith.constant 0 : index
      %c0_16 = arith.constant 0 : index
      %38 = vector.load %arg3[%c0_15, %c0_16] : memref<8x128xf32, #tpu.memory_space<vmem>>, vector<8x128xf32>
      tpu.vector_store %arg3[%c0_15, %c0_16], %37 {strides = array<i32>} : memref<8x128xf32, #tpu.memory_space<vmem>>, vector<8x128xf32>,
    } else {
    }
    %c0 = arith.constant 0 : index
    %c0_1 = arith.constant 0 : index
    %3 = vector.load %arg1[%c0, %c0_1] : memref<16x128xf32, #tpu.memory_space<vmem>>, vector<16x128xf32>
    %c0_2 = arith.constant 0 : index
    %c0_3 = arith.constant 0 : index
    %4 = vector.load %arg2[%c0_2, %c0_3] : memref<16x128xf32, #tpu.memory_space<vmem>>, vector<16x128xf32>
    %5 = math.absf %3 : vector<16x128xf32>
    %cst = arith.constant 0.000000e+00 : f32
    %6 = vector.broadcast %cst : f32 to vector<16x128xf32>
    %7 = arith.subf %6, %5 : vector<16x128xf32>
    %8 = math.exp %7 : vector<16x128xf32>
    %cst_4 = arith.constant 0.000000e+00 : f32
    %9 = vector.broadcast %cst_4 : f32 to vector<16x128xf32>
    %10 = arith.maximumf %3, %9 : vector<16x128xf32>
    %11 = arith.mulf %3, %4 : vector<16x128xf32>
    %12 = arith.subf %10, %11 : vector<16x128xf32>
    %13 = math.log1p %8 : vector<16x128xf32>
    %14 = arith.addf %12, %13 : vector<16x128xf32>
    %cst_5 = arith.constant 1.000000e+00 : f32
    %15 = vector.broadcast %cst_5 : f32 to vector<16x128xf32>
    %16 = arith.addf %15, %8 : vector<16x128xf32>
    %17 = tpu.reciprocal %16 {approx = true} : vector<16x128xf32> -> vector<16x128xf32>
    %cst_6 = arith.constant 0.000000e+00 : f32
    %18 = vector.broadcast %cst_6 : f32 to vector<16x128xf32>
    %19 = arith.cmpf oge, %3, %18 : vector<16x128xf32>
    %20 = arith.mulf %8, %17 : vector<16x128xf32>
    %21 = arith.select %19, %17, %20 : vector<16x128xi1>, vector<16x128xf32>
    %cst_7 = arith.constant -5.000000e-01 : f32
    %22 = vector.broadcast %cst_7 : f32 to vector<16x128xf32>
    %23 = arith.mulf %4, %22 : vector<16x128xf32>
    %cst_8 = arith.constant 7.500000e-01 : f32
    %24 = vector.broadcast %cst_8 : f32 to vector<16x128xf32>
    %25 = arith.addf %23, %24 : vector<16x128xf32>
    %26 = arith.subf %4, %21 : vector<16x128xf32>
    %27 = math.absf %26 : vector<16x128xf32>
    %28 = math.sqrt %27 : vector<16x128xf32>
    %29 = arith.mulf %27, %28 : vector<16x128xf32>
    %30 = arith.mulf %14, %25 : vector<16x128xf32>
    %31 = arith.mulf %30, %29 : vector<16x128xf32>
    %c0_9 = arith.constant 0 : index
    %c0_10 = arith.constant 0 : index
    %32 = vector.load %arg3[%c0_9, %c0_10] : memref<8x128xf32, #tpu.memory_space<vmem>>, vector<8x128xf32>
    %33 = vector.shape_cast %31 : vector<16x128xf32> to vector<2x8x128xf32>
    %cst_11 = arith.constant dense<0.000000e+00> : vector<8x128xf32>
    %34 = vector.multi_reduction <add>, %33, %cst_11 [0] : vector<2x8x128xf32> to vector<8x128xf32>
    %35 = arith.addf %32, %34 : vector<8x128xf32>
    %c0_12 = arith.constant 0 : index
    %c0_13 = arith.constant 0 : index
    %36 = vector.load %arg3[%c0_12, %c0_13] : memref<8x128xf32, #tpu.memory_space<vmem>>, vector<8x128xf32>
    tpu.vector_store %arg3[%c0_12, %c0_13], %35 {strides = array<i32>} : memref<8x128xf32, #tpu.memory_space<vmem>>, vector<8x128xf32>,
    return
  }
  func.func @transform_0(%arg0: i32) -> (i32, i32) {
    %c0_i32 = arith.constant 0 : i32
    %c0_i32_0 = arith.constant 0 : i32
    return %arg0, %c0_i32 : i32, i32
  }
  func.func @transform_1(%arg0: i32) -> (i32, i32) {
    %c0_i32 = arith.constant 0 : i32
    %c0_i32_0 = arith.constant 0 : i32
    return %arg0, %c0_i32 : i32, i32
  }
  func.func @transform_2(%arg0: i32) -> (i32, i32) {
    %c0_i32 = arith.constant 0 : i32
    %c0_i32_0 = arith.constant 0 : i32
    %c0_i32_1 = arith.constant 0 : i32
    return %c0_i32, %c0_i32_0 : i32, i32
  }
}

</mosaic_0001>

<llo_original>
// kernel: tpu_custom_call.1
$region0: #{tpu_custom_call.1}
  #allocation0 [shape = 'u32[]', space=smem, size = 0x4, offset = 0x4, fixed_abs, tag = 'smem constant byte address 0x4 - core index']
  #allocation1 [shape = 'u32[144,128]{1,0:T(1,128)}', space=vmem, size = 0x12000, scoped, tag = 'internal scratch']
  %s0 = inlined_call_operand.hbm [shape: f32[16,128], index: 0, kind: input, shape index: {}]
  %s1 = inlined_call_operand.hbm [shape: f32[16,128], index: 1, kind: input, shape index: {}]
  %s2 = inlined_call_operand.hbm [shape: f32[8,128], index: 2, kind: output, shape index: {}]
  %s3 = sld [smem:[#allocation0]]
  $region30: #{tpu_custom_call.1} parent=0
    _
  %s5 = ssub.s32 1, %s3
  %s6 = scalar_select 0, %s5, %s3
  $region1: #{tpu_custom_call.1} parent=0
    #allocation2 [shape = 'u8[8192]{0}', space=vmem, size = 0x2000, scoped, tag = 'input window, operand 0, single buffered']
    #allocation3 [shape = 's32[1]{0}', space=sflag, size = 0x4, scoped, tag = 'scoped memory for tpu_custom_call.1']
    #allocation4 [shape = 's32[1]{0}', space=sflag, size = 0x4, scoped, tag = 'scoped memory for tpu_custom_call.1']
    #allocation5 [shape = 'u8[8192]{0}', space=vmem, size = 0x2000, scoped, tag = 'input window, operand 1, single buffered']
    #allocation6 [shape = 's32[1]{0}', space=sflag, size = 0x4, scoped, tag = 'scoped memory for tpu_custom_call.1']
    #allocation7 [shape = 'u8[4096]{0}', space=vmem, size = 0x1000, scoped, tag = 'output window, operand 0, single buffered']
    %7 = vsyncpa [#allocation3], 0
    %8 = vsyncpa [#allocation6], 0
    %9 = vsyncpa [#allocation4], 0
    // Predicated region
    $region2: #{tpu_custom_call.1} parent=1 // pred_check
      _
    $region3: #{tpu_custom_call.1} parent=1 // pred_check_branch
      %11 = sbr.rel (0) target = $region5
    $region4: #{tpu_custom_call.1} parent=1 // pred_region
      %s13 = ssub.s32 256, 256
      %14 = vsyncadd [#allocation3], %s13
      %s15 = sshll.u32 [#allocation2], 4
      %s16 = int_to_ptr.vmem [resolvable:$true] %s15
      %21 = dma.hbm_to_vmem [thread:$0]  %s0, 256, %s16, [#allocation3], 128, 128, 8
    $region5: #{tpu_custom_call.1} parent=1 // pred_fallthru
      _
    // Predicated region
    $region6: #{tpu_custom_call.1} parent=1 // pred_check
      _
    $region7: #{tpu_custom_call.1} parent=1 // pred_check_branch
      %23 = sbr.rel (0) target = $region9
    $region8: #{tpu_custom_call.1} parent=1 // pred_region
      %s25 = ssub.s32 256, 256
      %26 = vsyncadd [#allocation6], %s25
      %s27 = sshll.u32 [#allocation5], 4
      %s28 = int_to_ptr.vmem [resolvable:$true] %s27
      %33 = dma.hbm_to_vmem [thread:$0]  %s1, 256, %s28, [#allocation6], 128, 128, 8
    $region9: #{tpu_custom_call.1} parent=1 // pred_fallthru
      _
    // Predicated region
    $region10: #{tpu_custom_call.1} parent=1 // pred_check
      _
    $region11: #{tpu_custom_call.1} parent=1 // pred_check_branch
      %35 = sbr.rel (0) target = $region13
    $region12: #{tpu_custom_call.1} parent=1 // pred_region
      %36 = dma.done [#allocation3], 256
    $region13: #{tpu_custom_call.1} parent=1 // pred_fallthru
      _
    // Predicated region
    $region14: #{tpu_custom_call.1} parent=1 // pred_check
      _
    $region15: #{tpu_custom_call.1} parent=1 // pred_check_branch
      %38 = sbr.rel (0) target = $region17
    $region16: #{tpu_custom_call.1} parent=1 // pred_region
      %39 = dma.done [#allocation6], 256
    $region17: #{tpu_custom_call.1} parent=1 // pred_fallthru
      _
    %p40 = scmp.eq.s32.totalorder 0, 0
    // Predicated region
    $region18: #{tpu_custom_call.1} parent=1 // pred_check
      %p41 = pneg %p40
    $region19: #{tpu_custom_call.1} parent=1 // pred_check_branch
      %43 = sbr.rel (%p41) target = $region21
    $region20: #{tpu_custom_call.1} parent=1 // pred_region
      %44 = vst [vmem:[#allocation7] sm:$0xff] 0.0
    $region21: #{tpu_custom_call.1} parent=1 // pred_fallthru
      _
    %v45 = vld [vmem:[#allocation2] sm:$0xff]
    %v46 = vld [vmem:[#allocation2 + $0x8] sm:$0xff]
    %v47 = vld [vmem:[#allocation5] sm:$0xff]
    %v48 = vld [vmem:[#allocation5 + $0x8] sm:$0xff]
    %v49 = vand.u32 2147483647, %v45
    %v50 = vand.u32 2147483647, %v46
    %v51 = vsub.f32 0.0, %v49
    %v52 = vsub.f32 0.0, %v50
    %v53 = vmul.f32 %v51, 1.442695
    %v54 = vpow.pop %v53
    %v55 = vmul.f32 %v52, 1.442695
    %v56 = vpow.pop %v55
    %v57 = vmax.f32 %v45, 0.0
    %v58 = vmax.f32 %v46, 0.0
    %v59 = vmul.f32 %v45, %v47
    %v60 = vmul.f32 %v46, %v48
    %v61 = vsub.f32 %v57, %v59
    %v62 = vsub.f32 %v58, %v60
    %v63 = vadd.f32 %v54, 1.0
    %v64 = vlog2.pop %v63
    %v65 = vmul.f32 %v64, 0.6931472
    %v66 = vmul.f32 -0.5, %v54
    %v67 = vadd.f32 %v66, 1.0
    %v68 = vmul.f32 %v67, %v54
    %v69 = vand.u32 2147483647, %v54
    %vm70 = vcmp.lt.f32.partialorder %v69, 0.0004427343
    %v71 = vsel %vm70, %v68, %v65
    %v72 = vadd.f32 %v56, 1.0
    %v73 = vlog2.pop %v72
    %v74 = vmul.f32 %v73, 0.6931472
    %v75 = vmul.f32 -0.5, %v56
    %v76 = vadd.f32 %v75, 1.0
    %v77 = vmul.f32 %v76, %v56
    %v78 = vand.u32 2147483647, %v56
    %vm79 = vcmp.lt.f32.partialorder %v78, 0.0004427343
    %v80 = vsel %vm79, %v77, %v74
    %v81 = vadd.f32 %v61, %v71
    %v82 = vadd.f32 %v62, %v80
    %v83 = vadd.f32 %v54, 1.0
    %v84 = vadd.f32 %v56, 1.0
    %v85 = vrcp.pop %v83
    %v86 = vrcp.pop %v84
    %vm87 = vcmp.ge.f32.partialorder %v45, 0.0
    %vm88 = vcmp.ge.f32.partialorder %v46, 0.0
    %v89 = vmul.f32 %v54, %v85
    %v90 = vmul.f32 %v56, %v86
    %v91 = vsel %vm87, %v85, %v89
    %v92 = vsel %vm88, %v86, %v90
    %v93 = vmul.f32 %v47, -0.5
    %v94 = vmul.f32 %v48, -0.5
    %v95 = vadd.f32 %v93, 0.75
    %v96 = vadd.f32 %v94, 0.75
    %v97 = vsub.f32 %v47, %v91
    %v98 = vsub.f32 %v48, %v92
    %v99 = vand.u32 2147483647, %v97
    %v100 = vand.u32 2147483647, %v98
    %v101 = vrsqrt.pop %v99
    %v102 = vmul.f32 %v99, %v101
    %vm103 = vcmp.eq.f32.partialorder %v99, inf
    %v104 = vsel %vm103, %v99, %v102
    %vm105 = vcmp.eq.f32.partialorder %v99, 0.0
    %v106 = vand.u32 %v99, 2147483648
    %v107 = vsel %vm105, %v106, %v104
    %v108 = vrsqrt.pop %v100
    %v109 = vmul.f32 %v100, %v108
    %vm110 = vcmp.eq.f32.partialorder %v100, inf
    %v111 = vsel %vm110, %v100, %v109
    %vm112 = vcmp.eq.f32.partialorder %v100, 0.0
    %v113 = vand.u32 %v100, 2147483648
    %v114 = vsel %vm112, %v113, %v111
    %v115 = vmul.f32 %v99, %v107
    %v116 = vmul.f32 %v100, %v114
    %v117 = vmul.f32 %v81, %v95
    %v118 = vmul.f32 %v82, %v96
    %v119 = vmul.f32 %v117, %v115
    %v120 = vmul.f32 %v118, %v116
    %v121 = vld [vmem:[#allocation7] sm:$0xff]
    %v122 = vadd.f32 %v119, %v120
    %v123 = vadd.f32 %v121, %v122
    %124 = vst [vmem:[#allocation7] sm:$0xff] %v123
    // Predicated region
    $region22: #{tpu_custom_call.1} parent=1 // pred_check
      _
    $region23: #{tpu_custom_call.1} parent=1 // pred_check_branch
      %126 = sbr.rel (0) target = $region25
    $region24: #{tpu_custom_call.1} parent=1 // pred_region
      %s128 = ssub.s32 128, 128
      %129 = vsyncadd [#allocation4], %s128
      %s131 = sshll.u32 [#allocation7], 4
      %s132 = int_to_ptr.vmem [resolvable:$true] %s131
      %134 = dma.vmem_to_hbm [thread:$0]  %s132, 128, %s2, [#allocation4]
    $region25: #{tpu_custom_call.1} parent=1 // pred_fallthru
      _
    // Predicated region
    $region26: #{tpu_custom_call.1} parent=1 // pred_check
      _
    $region27: #{tpu_custom_call.1} parent=1 // pred_check_branch
      %136 = sbr.rel (0) target = $region29
    $region28: #{tpu_custom_call.1} parent=1 // pred_region
      %137 = dma.done [#allocation4], 128
    $region29: #{tpu_custom_call.1} parent=1 // pred_fallthru
      _
    %138 = vsyncpa [#allocation3], 1
    %139 = vsyncpa [#allocation6], 1
    %140 = vsyncpa [#allocation4], 1

</llo_original>
